<compile_context>
chip_gen: v7x
topology: tpu7x:2x2x1
jax: 0.10.0
libtpu: 0.0.40
codegen_flags: <defaults>
</compile_context>

<pallas_src>
import jax
import jax.numpy as jnp
from jax.experimental import pallas as pl
from jax.experimental.pallas import tpu as pltpu

# ReplicationPad3d padding tuples are (W_left, W_right, H_top, H_bottom, D_front, D_back)
PADS = [
    (2, 2, 2, 2, 2, 2),   # pad_0 = ReplicationPad3d(2)
    (1, 2, 3, 4, 5, 6),   # pad_1
    (1, 0, 2, 0, 0, 3),   # pad_2
]
W_L = sum(p[0] for p in PADS)   # 4
W_R = sum(p[1] for p in PADS)   # 4
H_T = sum(p[2] for p in PADS)   # 7
H_B = sum(p[3] for p in PADS)   # 6
D_F = sum(p[4] for p in PADS)   # 7
D_B = sum(p[5] for p in PADS)   # 11


def _rep_pad3d_kernel(x_ref, o_ref):
    # x_ref: (D, H, W) full source volume for one (n, c)
    # o_ref: (D_out, H_out, W_out) full padded volume for the same (n, c)
    D, H, W = x_ref.shape
    D_out, H_out, W_out = o_ref.shape
    x = x_ref[...]

    # ---- H/W replication of the D real depth planes (direct slice stores) ----
    # Center block.
    o_ref[pl.ds(D_F, D), pl.ds(H_T, H), pl.ds(W_L, W)] = x
    # Top rows <- row 0, bottom rows <- row H-1 (sublane-axis replication).
    o_ref[pl.ds(D_F, D), pl.ds(0, H_T), pl.ds(W_L, W)] = jnp.broadcast_to(
        x[:, 0:1, :], (D, H_T, W))
    o_ref[pl.ds(D_F, D), pl.ds(H_T + H, H_B), pl.ds(W_L, W)] = jnp.broadcast_to(
        x[:, H - 1:H, :], (D, H_B, W))
    # Left/right columns <- the already H-padded leftmost / rightmost valid
    # columns, read back from the output block (lane-axis replication).
    col_l = o_ref[pl.ds(D_F, D), :, pl.ds(W_L, 1)]               # (D, H_out, 1)
    col_r = o_ref[pl.ds(D_F, D), :, pl.ds(W_L + W - 1, 1)]       # (D, H_out, 1)
    o_ref[pl.ds(D_F, D), :, pl.ds(0, W_L)] = jnp.broadcast_to(
        col_l, (D, H_out, W_L))
    o_ref[pl.ds(D_F, D), :, pl.ds(W_L + W, W_R)] = jnp.broadcast_to(
        col_r, (D, H_out, W_R))

    # ---- Depth replication: front planes <- first padded plane, back <- last ----
    front = o_ref[pl.ds(D_F, 1), :, :]                           # (1, H_out, W_out)
    back = o_ref[pl.ds(D_F + D - 1, 1), :, :]                    # (1, H_out, W_out)
    o_ref[pl.ds(0, D_F), :, :] = jnp.broadcast_to(front, (D_F, H_out, W_out))
    o_ref[pl.ds(D_F + D, D_B), :, :] = jnp.broadcast_to(back, (D_B, H_out, W_out))


def replication_pad3d(x):
    N, C, D, H, W = x.shape
    D_out = D + D_F + D_B
    H_out = H + H_T + H_B
    W_out = W + W_L + W_R

    return pl.pallas_call(
        _rep_pad3d_kernel,
        out_shape=jax.ShapeDtypeStruct((N, C, D_out, H_out, W_out), x.dtype),
        grid=(N, C),
        in_specs=[
            pl.BlockSpec((None, None, D, H, W), lambda n, c: (n, c, 0, 0, 0)),
        ],
        out_specs=pl.BlockSpec(
            (None, None, D_out, H_out, W_out), lambda n, c: (n, c, 0, 0, 0)),
        compiler_params=pltpu.CompilerParams(
            dimension_semantics=("parallel", "parallel")),
    )(x)


def _reference(x):
    # Pure-JAX reference: apply the three replication pads sequentially.
    for (wl, wr, ht, hb, df, db) in PADS:
        x = jnp.pad(x, ((0, 0), (0, 0), (df, db), (ht, hb), (wl, wr)), mode="edge")
    return x


if __name__ == "__main__":
    key = jax.random.PRNGKey(0)
    # Small NCDHW input: N=2, C=3, D=4, H=6, W=8
    x = jax.random.normal(key, (2, 3, 4, 6, 8), dtype=jnp.float32)

    y = replication_pad3d(x)
    jax.block_until_ready(y)

    y_ref = _reference(x)
    assert y.shape == y_ref.shape, (y.shape, y_ref.shape)
    assert jnp.allclose(y, y_ref), "mismatch vs sequential replication-pad reference"
    print("KERNEL_OK")
</pallas_src>

<mosaic_0001>
module attributes {stable_mosaic.version = 11 : i64} {
  func.func @_rep_pad3d_kernel(%arg0: i32, %arg1: i32, %arg2: memref<1x1x4x6x8xf32, #tpu.memory_space<vmem>>, %arg3: memref<1x1x22x19x16xf32, #tpu.memory_space<vmem>>) attributes {dimension_semantics = [#tpu.dimension_semantics<parallel>, #tpu.dimension_semantics<parallel>], iteration_bounds = array<i64: 2, 3>, scalar_prefetch = 0 : i64, scratch_operands = 0 : i64, tpu.core_type = #tpu.core_type<tc>, window_params = [{transform_indices = @transform_0, window_bounds = array<i64: 1, 1, 4, 6, 8>}, {transform_indices = @transform_1, window_bounds = array<i64: 1, 1, 22, 19, 16>}]} {
    %c0 = arith.constant 0 : index
    %c0_0 = arith.constant 0 : index
    %c0_1 = arith.constant 0 : index
    %c0_2 = arith.constant 0 : index
    %c0_3 = arith.constant 0 : index
    %0 = vector.load %arg2[%c0, %c0_0, %c0_1, %c0_2, %c0_3] : memref<1x1x4x6x8xf32, #tpu.memory_space<vmem>>, vector<1x1x4x6x8xf32>
    %1 = vector.shape_cast %0 : vector<1x1x4x6x8xf32> to vector<4x6x8xf32>
    %c0_4 = arith.constant 0 : index
    %c0_5 = arith.constant 0 : index
    %c7 = arith.constant 7 : index
    %c7_6 = arith.constant 7 : index
    %c4 = arith.constant 4 : index
    %2 = vector.load %arg3[%c0_4, %c0_5, %c7, %c7_6, %c4] : memref<1x1x22x19x16xf32, #tpu.memory_space<vmem>>, vector<1x1x4x6x8xf32>
    %3 = vector.shape_cast %2 : vector<1x1x4x6x8xf32> to vector<4x6x8xf32>
    %4 = vector.shape_cast %1 : vector<4x6x8xf32> to vector<1x1x4x6x8xf32>
    tpu.vector_store %arg3[%c0_4, %c0_5, %c7, %c7_6, %c4], %4 {strides = array<i32>} : memref<1x1x22x19x16xf32, #tpu.memory_space<vmem>>, vector<1x1x4x6x8xf32>,
    %5 = vector.extract_strided_slice %1 {offsets = [0, 0, 0], sizes = [4, 1, 8], strides = [1, 1, 1]} : vector<4x6x8xf32> to vector<4x1x8xf32>
    %6 = vector.shape_cast %5 : vector<4x1x8xf32> to vector<4x1x8xf32>
    %7 = vector.broadcast %6 : vector<4x1x8xf32> to vector<4x7x8xf32>
    %c0_7 = arith.constant 0 : index
    %c0_8 = arith.constant 0 : index
    %c7_9 = arith.constant 7 : index
    %c0_10 = arith.constant 0 : index
    %c4_11 = arith.constant 4 : index
    %8 = vector.load %arg3[%c0_7, %c0_8, %c7_9, %c0_10, %c4_11] : memref<1x1x22x19x16xf32, #tpu.memory_space<vmem>>, vector<1x1x4x7x8xf32>
    %9 = vector.shape_cast %8 : vector<1x1x4x7x8xf32> to vector<4x7x8xf32>
    %10 = vector.shape_cast %7 : vector<4x7x8xf32> to vector<1x1x4x7x8xf32>
    tpu.vector_store %arg3[%c0_7, %c0_8, %c7_9, %c0_10, %c4_11], %10 {strides = array<i32>} : memref<1x1x22x19x16xf32, #tpu.memory_space<vmem>>, vector<1x1x4x7x8xf32>,
    %11 = vector.extract_strided_slice %1 {offsets = [0, 5, 0], sizes = [4, 1, 8], strides = [1, 1, 1]} : vector<4x6x8xf32> to vector<4x1x8xf32>
    %12 = vector.shape_cast %11 : vector<4x1x8xf32> to vector<4x1x8xf32>
    %13 = vector.broadcast %12 : vector<4x1x8xf32> to vector<4x6x8xf32>
    %c0_12 = arith.constant 0 : index
    %c0_13 = arith.constant 0 : index
    %c7_14 = arith.constant 7 : index
    %c13 = arith.constant 13 : index
    %c4_15 = arith.constant 4 : index
    %14 = vector.load %arg3[%c0_12, %c0_13, %c7_14, %c13, %c4_15] : memref<1x1x22x19x16xf32, #tpu.memory_space<vmem>>, vector<1x1x4x6x8xf32>
    %15 = vector.shape_cast %14 : vector<1x1x4x6x8xf32> to vector<4x6x8xf32>
    %16 = vector.shape_cast %13 : vector<4x6x8xf32> to vector<1x1x4x6x8xf32>
    tpu.vector_store %arg3[%c0_12, %c0_13, %c7_14, %c13, %c4_15], %16 {strides = array<i32>} : memref<1x1x22x19x16xf32, #tpu.memory_space<vmem>>, vector<1x1x4x6x8xf32>,
    %c0_16 = arith.constant 0 : index
    %c0_17 = arith.constant 0 : index
    %c7_18 = arith.constant 7 : index
    %c0_19 = arith.constant 0 : index
    %c4_20 = arith.constant 4 : index
    %17 = vector.load %arg3[%c0_16, %c0_17, %c7_18, %c0_19, %c4_20] : memref<1x1x22x19x16xf32, #tpu.memory_space<vmem>>, vector<1x1x4x19x1xf32>
    %18 = vector.shape_cast %17 : vector<1x1x4x19x1xf32> to vector<4x19x1xf32>
    %c0_21 = arith.constant 0 : index
    %c0_22 = arith.constant 0 : index
    %c7_23 = arith.constant 7 : index
    %c0_24 = arith.constant 0 : index
    %c11 = arith.constant 11 : index
    %19 = vector.load %arg3[%c0_21, %c0_22, %c7_23, %c0_24, %c11] : memref<1x1x22x19x16xf32, #tpu.memory_space<vmem>>, vector<1x1x4x19x1xf32>
    %20 = vector.shape_cast %19 : vector<1x1x4x19x1xf32> to vector<4x19x1xf32>
    %21 = vector.shape_cast %18 : vector<4x19x1xf32> to vector<4x19x1xf32>
    %22 = vector.broadcast %21 : vector<4x19x1xf32> to vector<4x19x4xf32>
    %c0_25 = arith.constant 0 : index
    %c0_26 = arith.constant 0 : index
    %c7_27 = arith.constant 7 : index
    %c0_28 = arith.constant 0 : index
    %c0_29 = arith.constant 0 : index
    %23 = vector.load %arg3[%c0_25, %c0_26, %c7_27, %c0_28, %c0_29] : memref<1x1x22x19x16xf32, #tpu.memory_space<vmem>>, vector<1x1x4x19x4xf32>
    %24 = vector.shape_cast %23 : vector<1x1x4x19x4xf32> to vector<4x19x4xf32>
    %25 = vector.shape_cast %22 : vector<4x19x4xf32> to vector<1x1x4x19x4xf32>
    tpu.vector_store %arg3[%c0_25, %c0_26, %c7_27, %c0_28, %c0_29], %25 {strides = array<i32>} : memref<1x1x22x19x16xf32, #tpu.memory_space<vmem>>, vector<1x1x4x19x4xf32>,
    %26 = vector.shape_cast %20 : vector<4x19x1xf32> to vector<4x19x1xf32>
    %27 = vector.broadcast %26 : vector<4x19x1xf32> to vector<4x19x4xf32>
    %c0_30 = arith.constant 0 : index
    %c0_31 = arith.constant 0 : index
    %c7_32 = arith.constant 7 : index
    %c0_33 = arith.constant 0 : index
    %c12 = arith.constant 12 : index
    %28 = vector.load %arg3[%c0_30, %c0_31, %c7_32, %c0_33, %c12] : memref<1x1x22x19x16xf32, #tpu.memory_space<vmem>>, vector<1x1x4x19x4xf32>
    %29 = vector.shape_cast %28 : vector<1x1x4x19x4xf32> to vector<4x19x4xf32>
    %30 = vector.shape_cast %27 : vector<4x19x4xf32> to vector<1x1x4x19x4xf32>
    tpu.vector_store %arg3[%c0_30, %c0_31, %c7_32, %c0_33, %c12], %30 {strides = array<i32>} : memref<1x1x22x19x16xf32, #tpu.memory_space<vmem>>, vector<1x1x4x19x4xf32>,
    %c0_34 = arith.constant 0 : index
    %c0_35 = arith.constant 0 : index
    %c7_36 = arith.constant 7 : index
    %c0_37 = arith.constant 0 : index
    %c0_38 = arith.constant 0 : index
    %31 = vector.load %arg3[%c0_34, %c0_35, %c7_36, %c0_37, %c0_38] : memref<1x1x22x19x16xf32, #tpu.memory_space<vmem>>, vector<1x1x1x19x16xf32>
    %32 = vector.shape_cast %31 : vector<1x1x1x19x16xf32> to vector<1x19x16xf32>
    %c0_39 = arith.constant 0 : index
    %c0_40 = arith.constant 0 : index
    %c10 = arith.constant 10 : index
    %c0_41 = arith.constant 0 : index
    %c0_42 = arith.constant 0 : index
    %33 = vector.load %arg3[%c0_39, %c0_40, %c10, %c0_41, %c0_42] : memref<1x1x22x19x16xf32, #tpu.memory_space<vmem>>, vector<1x1x1x19x16xf32>
    %34 = vector.shape_cast %33 : vector<1x1x1x19x16xf32> to vector<1x19x16xf32>
    %35 = vector.shape_cast %32 : vector<1x19x16xf32> to vector<1x19x16xf32>
    %36 = vector.broadcast %35 : vector<1x19x16xf32> to vector<7x19x16xf32>
    %c0_43 = arith.constant 0 : index
    %c0_44 = arith.constant 0 : index
    %c0_45 = arith.constant 0 : index
    %c0_46 = arith.constant 0 : index
    %c0_47 = arith.constant 0 : index
    %37 = vector.load %arg3[%c0_43, %c0_44, %c0_45, %c0_46, %c0_47] : memref<1x1x22x19x16xf32, #tpu.memory_space<vmem>>, vector<1x1x7x19x16xf32>
    %38 = vector.shape_cast %37 : vector<1x1x7x19x16xf32> to vector<7x19x16xf32>
    %39 = vector.shape_cast %36 : vector<7x19x16xf32> to vector<1x1x7x19x16xf32>
    tpu.vector_store %arg3[%c0_43, %c0_44, %c0_45, %c0_46, %c0_47], %39 {strides = array<i32>} : memref<1x1x22x19x16xf32, #tpu.memory_space<vmem>>, vector<1x1x7x19x16xf32>,
    %40 = vector.shape_cast %34 : vector<1x19x16xf32> to vector<1x19x16xf32>
    %41 = vector.broadcast %40 : vector<1x19x16xf32> to vector<11x19x16xf32>
    %c0_48 = arith.constant 0 : index
    %c0_49 = arith.constant 0 : index
    %c11_50 = arith.constant 11 : index
    %c0_51 = arith.constant 0 : index
    %c0_52 = arith.constant 0 : index
    %42 = vector.load %arg3[%c0_48, %c0_49, %c11_50, %c0_51, %c0_52] : memref<1x1x22x19x16xf32, #tpu.memory_space<vmem>>, vector<1x1x11x19x16xf32>
    %43 = vector.shape_cast %42 : vector<1x1x11x19x16xf32> to vector<11x19x16xf32>
    %44 = vector.shape_cast %41 : vector<11x19x16xf32> to vector<1x1x11x19x16xf32>
    tpu.vector_store %arg3[%c0_48, %c0_49, %c11_50, %c0_51, %c0_52], %44 {strides = array<i32>} : memref<1x1x22x19x16xf32, #tpu.memory_space<vmem>>, vector<1x1x11x19x16xf32>,
    return
  }
  func.func @transform_0(%arg0: i32, %arg1: i32) -> (i32, i32, i32, i32, i32) {
    %c0_i32 = arith.constant 0 : i32
    %c0_i32_0 = arith.constant 0 : i32
    %c0_i32_1 = arith.constant 0 : i32
    %c0_i32_2 = arith.constant 0 : i32
    return %arg0, %arg1, %c0_i32, %c0_i32_0, %c0_i32_1 : i32, i32, i32, i32, i32
  }
  func.func @transform_1(%arg0: i32, %arg1: i32) -> (i32, i32, i32, i32, i32) {
    %c0_i32 = arith.constant 0 : i32
    %c0_i32_0 = arith.constant 0 : i32
    %c0_i32_1 = arith.constant 0 : i32
    %c0_i32_2 = arith.constant 0 : i32
    return %arg0, %arg1, %c0_i32, %c0_i32_0, %c0_i32_1 : i32, i32, i32, i32, i32
  }
}

</mosaic_0001>

<llo_original>
// kernel: tpu_custom_call.1
$region0: #{tpu_custom_call.1}
  #allocation0 [shape = 'u32[]', space=smem, size = 0x4, offset = 0x4, fixed_abs, tag = 'smem constant byte address 0x4 - core index']
  #allocation1 [shape = 'u32[144,128]{1,0:T(1,128)}', space=vmem, size = 0x12000, scoped, tag = 'internal scratch']
  %s0 = inlined_call_operand.vmem [shape: f32[2,3,4,6,8], index: 0, kind: input, shape index: {}]
  %s1 = inlined_call_operand.vmem [shape: f32[2,3,22,19,16], index: 1, kind: output, shape index: {}]
  %s2 = sld [smem:[#allocation0]]
  $region37: #{tpu_custom_call.1} parent=0
    _
  %s4 = ssub.s32 1, %s2
  %s5 = scalar_select 0, %s4, %s2
  loop: start=0, step=1, limit=8
  $region2: #{tpu_custom_call.1} parent=0 // loop_pre_header
    _
  $region3: #{tpu_custom_call.1} parent=0 // loop_header
    %s7 = sphi 0, %s11
    %p8 = scmp.ge.s32.totalorder %s7, 8
    %s14 = sphi 0, %s26
    %s15 = sphi 0, %s22
    %s16 = sphi 0, %s14
    %s17 = sphi 0, %s15
    %s18 = sphi 0, %s16
    %s19 = sphi 0, %s17
    %s31 = sphi 0, %s33
    %s34 = sphi 0, %s31
    %s35 = sphi 0, %s34
    %s51 = sphi 0, %s35
    %s59 = sphi 0, %s61
    %s62 = sphi 0, %s59
    %s63 = sphi 0, %s62
    %s79 = sphi 0, %s63
  $region4: #{tpu_custom_call.1} parent=0 // loop_header_branch
    %10 = sbr.rel (%p8) target = $region8
  $region5: #{tpu_custom_call.1} parent=0 // loop_body
    %s12 = ssub.s32 %s7, 1
    %s13 = ssub.s32 %s7, 2
    %s20 = sadd.s32 1, %s15
    %p21 = scmp.ge.s32.totalorder %s20, 3
    %s22 = scalar_select %p21, 0, %s20
    %s23 = sadd.s32 1, %s14
    %s24 = scalar_select %p21, %s23, %s14
    %p25 = scmp.ge.s32.totalorder %s24, 2
    %s26 = scalar_select %p25, 0, %s24
    %s27 = ssub.s32 %s14, %s26
    %s28 = ssub.s32 %s15, %s22
    %s29 = sor.u32 %s27, %s28
    %p30 = scmp.eq.s32.totalorder %s29, 0
    %s32 = sadd.s32 %s31, 1
    %s33 = scalar_select %p30, %s31, %s32
    %p36 = pneg %p30
    %p37 = scmp.eq.s32.totalorder %s7, 5
    %p38 = por %p36, %p37
    %p39 = scmp.ne.s32.totalorder %s31, %s34
    %p40 = scmp.eq.s32.totalorder %s7, 0
    %p41 = por %p39, %p40
    %p42 = scmp.ne.s32.totalorder %s31, %s34
    %p43 = scmp.eq.s32.totalorder %s12, 5
    %p44 = por %p42, %p43
    %p45 = scmp.ne.s32.totalorder %s34, %s35
    %p46 = scmp.eq.s32.totalorder %s12, 0
    %p47 = por %p45, %p46
    %p48 = scmp.ne.s32.totalorder %s34, %s35
    %p49 = scmp.eq.s32.totalorder %s13, 5
    %p50 = por %p48, %p49
    %p52 = scmp.ne.s32.totalorder %s35, %s51
    %p53 = scmp.eq.s32.totalorder %s13, 0
    %p54 = por %p52, %p53
    %s55 = ssub.s32 %s14, %s26
    %s56 = ssub.s32 %s15, %s22
    %s57 = sor.u32 %s55, %s56
    %p58 = scmp.eq.s32.totalorder %s57, 0
    %s60 = sadd.s32 %s59, 1
    %s61 = scalar_select %p58, %s59, %s60
    %p64 = pneg %p58
    %p65 = scmp.eq.s32.totalorder %s7, 5
    %p66 = por %p64, %p65
    %p67 = scmp.ne.s32.totalorder %s59, %s62
    %p68 = scmp.eq.s32.totalorder %s7, 0
    %p69 = por %p67, %p68
    %p70 = scmp.ne.s32.totalorder %s59, %s62
    %p71 = scmp.eq.s32.totalorder %s12, 5
    %p72 = por %p70, %p71
    %p73 = scmp.ne.s32.totalorder %s62, %s63
    %p74 = scmp.eq.s32.totalorder %s12, 0
    %p75 = por %p73, %p74
    %p76 = scmp.ne.s32.totalorder %s62, %s63
    %p77 = scmp.eq.s32.totalorder %s13, 5
    %p78 = por %p76, %p77
    %p80 = scmp.ne.s32.totalorder %s63, %s79
    %p81 = scmp.eq.s32.totalorder %s13, 0
    %p82 = por %p80, %p81
    %p83 = scmp.le.s32.totalorder 1, %s7
    %p84 = scmp.lt.s32.totalorder %s7, 7
    %p85 = pnand %p83, %p84
    %p86 = pneg %p85
    // Predicated region
    $region9: #{tpu_custom_call.1} parent=5 // pred_check
      _
    $region10: #{tpu_custom_call.1} parent=5 // pred_check_branch
      %88 = sbr.rel (%p85) target = $region12
    $region11: #{tpu_custom_call.1} parent=5 // pred_region
      %s89 = ssub.s32 %s7, 1
    $region12: #{tpu_custom_call.1} parent=5 // pred_fallthru
      _
    %p90 = scmp.lt.s32.totalorder %s7, 6
    // Predicated region
    $region13: #{tpu_custom_call.1} parent=5 // pred_check
      %p91 = pneg %p90
    $region14: #{tpu_custom_call.1} parent=5 // pred_check_branch
      %93 = sbr.rel (%p91) target = $region16
    $region15: #{tpu_custom_call.1} parent=5 // pred_region
      // Predicated region
      $region17: #{tpu_custom_call.1} parent=15 // pred_check
        %p94 = pneg %p41
      $region18: #{tpu_custom_call.1} parent=15 // pred_check_branch
        %96 = sbr.rel (%p94) target = $region20
      $region19: #{tpu_custom_call.1} parent=15 // pred_region
        %p97 = scmp.lt.s32.totalorder %s14, 1
        %s98 = scalar_select %p97, %s14, 1
        %p99 = scmp.lt.s32.totalorder %s15, 2
        %s100 = scalar_select %p99, %s15, 2
        %s101 = smul.addr %s100, 4
        %s102 = smul.addr %s98, 12
        %s103 = sadd.s32 %s101, %s102
        %s104 = smul.addr %s103, 8
        %s105 = scalar_lea.vmem %s0, %s104
      $region20: #{tpu_custom_call.1} parent=15 // pred_fallthru
        _
    $region16: #{tpu_custom_call.1} parent=5 // pred_fallthru
      _
    %p106 = scmp.le.s32.totalorder 1, %s7
    %p107 = scmp.lt.s32.totalorder %s7, 7
    %p108 = pnand %p106, %p107
    %p109 = pneg %p108
    // Predicated region
    $region21: #{tpu_custom_call.1} parent=5 // pred_check
      _
    $region22: #{tpu_custom_call.1} parent=5 // pred_check_branch
      %111 = sbr.rel (%p108) target = $region24
    $region23: #{tpu_custom_call.1} parent=5 // pred_region
      %s112 = ssub.s32 %s7, 1
      %p113 = scmp.lt.s32.totalorder %s16, 1
      %s114 = scalar_select %p113, %s16, 1
      %p115 = scmp.lt.s32.totalorder %s17, 2
      %s116 = scalar_select %p115, %s17, 2
      %s117 = smul.addr %s116, 4
      %s118 = smul.addr %s114, 12
      %s119 = sadd.s32 %s117, %s118
      %s120 = smul.addr %s119, 8
      %s121 = scalar_lea.vmem %s0, %s120
      %p122 = pneg %p47
      %p123 = pneg %p44
      %p124 = pneg %p75
      %p125 = pneg %p72
      %p126 = scmp.lt.s32.totalorder %s16, 1
      %s127 = scalar_select %p126, %s16, 1
      %p128 = scmp.lt.s32.totalorder %s17, 2
      %s129 = scalar_select %p128, %s17, 2
      %s130 = smul.addr %s129, 66
      %s131 = smul.addr %s127, 198
      %s132 = sadd.s32 %s130, %s131
      %s133 = smul.addr %s132, 8
      %s134 = scalar_lea.vmem %s1, %s133
      %p135 = scmp.lt.s32.totalorder %s16, 1
      %s136 = scalar_select %p135, %s16, 1
      %p137 = scmp.lt.s32.totalorder %s17, 2
      %s138 = scalar_select %p137, %s17, 2
      %s139 = smul.addr %s138, 4
      %s140 = smul.addr %s136, 12
      %s141 = sadd.s32 %s139, %s140
      %s142 = smul.addr %s141, 8
      %s143 = scalar_lea.vmem %s0, %s142
      %p144 = scmp.lt.s32.totalorder %s16, 1
      %s145 = scalar_select %p144, %s16, 1
      %p146 = scmp.lt.s32.totalorder %s17, 2
      %s147 = scalar_select %p146, %s17, 2
      %s148 = smul.addr %s147, 66
      %s149 = smul.addr %s145, 198
      %s150 = sadd.s32 %s148, %s149
      %s151 = smul.addr %s150, 8
      %s152 = scalar_lea.vmem %s1, %s151
      %v153 = vld [vmem:[%s143] sm:$0x3f]
      %v154 = vld [vmem:[%s143 + $0x8] sm:$0x3f]
      %v155 = vld [vmem:[%s143 + $0x10] sm:$0x3f]
      %v156 = vld [vmem:[%s143 + $0x18] sm:$0x3f]
      %161 = vrot.lane.b32.xlu0 %v153, 4
      %v162 = vpop.permute.xlu0 %161
      %163 = vrot.lane.b32.xlu0 %v154, 4
      %v164 = vpop.permute.xlu0 %163
      %165 = vrot.lane.b32.xlu0 %v155, 4
      %v166 = vpop.permute.xlu0 %165
      %167 = vrot.lane.b32.xlu0 %v156, 4
      %v168 = vpop.permute.xlu0 %167
      %s173 = scalar_lea.vmem %s152, 168
      %vm174 = vcmask 95264
      %175 = vst.msk [vmem:[%s173 + $0x7] sm:$0x3f] %vm174, %v162
      %176 = vst.msk [vmem:[%s173 + $0x1f] sm:$0x3f] %vm174, %v164
      %177 = vst.msk [vmem:[%s173 + $0x37] sm:$0x3f] %vm174, %v166
      %178 = vst.msk [vmem:[%s173 + $0x4f] sm:$0x3f] %vm174, %v168
      %v179 = vlaneseq
      %v180 = vshrl.u32 %v179, 7
      %v181 = vsub.s32 0, %v180
      %v182 = vrot.slane %v153, %v181
      %v183 = vlaneseq
      %v184 = vshrl.u32 %v183, 7
      %v185 = vsub.s32 0, %v184
      %v186 = vrot.slane %v154, %v185
      %v187 = vlaneseq
      %v188 = vshrl.u32 %v187, 7
      %v189 = vsub.s32 0, %v188
      %v190 = vrot.slane %v155, %v189
      %v191 = vlaneseq
      %v192 = vshrl.u32 %v191, 7
      %v193 = vsub.s32 0, %v192
      %v194 = vrot.slane %v156, %v193
      %199 = vrot.lane.b32.xlu0 %v182, 4
      %v200 = vpop.permute.xlu0 %199
      %201 = vrot.lane.b32.xlu0 %v186, 4
      %v202 = vpop.permute.xlu0 %201
      %203 = vrot.lane.b32.xlu0 %v190, 4
      %v204 = vpop.permute.xlu0 %203
      %205 = vrot.lane.b32.xlu0 %v194, 4
      %v206 = vpop.permute.xlu0 %205
      %vm211 = vcmask 96288
      %212 = vst.msk [vmem:[%s173] sm:$0x7f] %vm211, %v200
      %213 = vst.msk [vmem:[%s173 + $0x18] sm:$0x7f] %vm211, %v202
      %214 = vst.msk [vmem:[%s173 + $0x30] sm:$0x7f] %vm211, %v204
      %215 = vst.msk [vmem:[%s173 + $0x48] sm:$0x7f] %vm211, %v206
      %v216 = vlaneseq
      %v217 = vshrl.u32 %v216, 7
      %v218 = vsub.s32 5, %v217
      %v219 = vrot.slane %v153, %v218
      %v220 = vlaneseq
      %v221 = vshrl.u32 %v220, 7
      %v222 = vsub.s32 5, %v221
      %v223 = vrot.slane %v154, %v222
      %v224 = vlaneseq
      %v225 = vshrl.u32 %v224, 7
      %v226 = vsub.s32 5, %v225
      %v227 = vrot.slane %v155, %v226
      %v228 = vlaneseq
      %v229 = vshrl.u32 %v228, 7
      %v230 = vsub.s32 5, %v229
      %v231 = vrot.slane %v156, %v230
      %236 = vrot.lane.b32.xlu0 %v219, 4
      %v237 = vpop.permute.xlu0 %236
      %238 = vrot.lane.b32.xlu0 %v223, 4
      %v239 = vpop.permute.xlu0 %238
      %240 = vrot.lane.b32.xlu0 %v227, 4
      %v241 = vpop.permute.xlu0 %240
      %242 = vrot.lane.b32.xlu0 %v231, 4
      %v243 = vpop.permute.xlu0 %242
      %248 = vst.msk [vmem:[%s173 + $0xd] sm:$0x3f] %vm174, %v237
      %249 = vst.msk [vmem:[%s173 + $0x25] sm:$0x3f] %vm174, %v239
      %250 = vst.msk [vmem:[%s173 + $0x3d] sm:$0x3f] %vm174, %v241
      %251 = vst.msk [vmem:[%s173 + $0x55] sm:$0x3f] %vm174, %v243
      %v252 = vld [vmem:[%s173] sm:$0xff]
      %v253 = vld [vmem:[%s173 + $0x8] sm:$0xff]
      %v254 = vld [vmem:[%s173 + $0x10] sm:$0x7]
      %v255 = vld [vmem:[%s173 + $0x18] sm:$0xff]
      %v256 = vld [vmem:[%s173 + $0x20] sm:$0xff]
      %v257 = vld [vmem:[%s173 + $0x28] sm:$0x7]
      %v258 = vld [vmem:[%s173 + $0x30] sm:$0xff]
      %v259 = vld [vmem:[%s173 + $0x38] sm:$0xff]
      %v260 = vld [vmem:[%s173 + $0x40] sm:$0x7]
      %v261 = vld [vmem:[%s173 + $0x48] sm:$0xff]
      %v262 = vld [vmem:[%s173 + $0x50] sm:$0xff]
      %v263 = vld [vmem:[%s173 + $0x58] sm:$0x7]
      %265 = vset.pattern.permute.xlu0 4
      %266 = vperm.xlu0 %265, %v252
      %v267 = vpop.permute.xlu0 %266
      %270 = vset.pattern.permute.xlu0 4
      %271 = vperm.xlu0 %270, %v253
      %v272 = vpop.permute.xlu0 %271
      %275 = vset.pattern.permute.xlu0 4
      %276 = vperm.xlu0 %275, %v254
      %v277 = vpop.permute.xlu0 %276
      %280 = vset.pattern.permute.xlu0 4
      %281 = vperm.xlu0 %280, %v255
      %v282 = vpop.permute.xlu0 %281
      %285 = vset.pattern.permute.xlu0 4
      %286 = vperm.xlu0 %285, %v256
      %v287 = vpop.permute.xlu0 %286
      %290 = vset.pattern.permute.xlu0 4
      %291 = vperm.xlu0 %290, %v257
      %v292 = vpop.permute.xlu0 %291
      %295 = vset.pattern.permute.xlu0 4
      %296 = vperm.xlu0 %295, %v258
      %v297 = vpop.permute.xlu0 %296
      %300 = vset.pattern.permute.xlu0 4
      %301 = vperm.xlu0 %300, %v259
      %v302 = vpop.permute.xlu0 %301
      %305 = vset.pattern.permute.xlu0 4
      %306 = vperm.xlu0 %305, %v260
      %v307 = vpop.permute.xlu0 %306
      %310 = vset.pattern.permute.xlu0 4
      %311 = vperm.xlu0 %310, %v261
      %v312 = vpop.permute.xlu0 %311
      %315 = vset.pattern.permute.xlu0 4
      %316 = vperm.xlu0 %315, %v262
      %v317 = vpop.permute.xlu0 %316
      %320 = vset.pattern.permute.xlu0 4
      %321 = vperm.xlu0 %320, %v263
      %v322 = vpop.permute.xlu0 %321
      %vm324 = vcmask 31744
      %325 = vst.msk [vmem:[%s173] sm:$0xff] %vm324, %v267
      %326 = vst.msk [vmem:[%s173 + $0x8] sm:$0xff] %vm324, %v272
      %vm327 = vcmask 26624
      %328 = vst.msk [vmem:[%s173 + $0x10] sm:$0x7] %vm327, %v277
      %329 = vst.msk [vmem:[%s173 + $0x18] sm:$0xff] %vm324, %v282
      %330 = vst.msk [vmem:[%s173 + $0x20] sm:$0xff] %vm324, %v287
      %331 = vst.msk [vmem:[%s173 + $0x28] sm:$0x7] %vm327, %v292
      %332 = vst.msk [vmem:[%s173 + $0x30] sm:$0xff] %vm324, %v297
      %333 = vst.msk [vmem:[%s173 + $0x38] sm:$0xff] %vm324, %v302
      %334 = vst.msk [vmem:[%s173 + $0x40] sm:$0x7] %vm327, %v307
      %335 = vst.msk [vmem:[%s173 + $0x48] sm:$0xff] %vm324, %v312
      %336 = vst.msk [vmem:[%s173 + $0x50] sm:$0xff] %vm324, %v317
      %337 = vst.msk [vmem:[%s173 + $0x58] sm:$0x7] %vm327, %v322
      %338 = vset.pattern.permute.xlu0 11
      %339 = vperm.xlu0 %338, %v252
      %v340 = vpop.permute.xlu0 %339
      %342 = vset.pattern.permute.xlu0 11
      %343 = vperm.xlu0 %342, %v253
      %v344 = vpop.permute.xlu0 %343
      %346 = vset.pattern.permute.xlu0 11
      %347 = vperm.xlu0 %346, %v254
      %v348 = vpop.permute.xlu0 %347
      %350 = vset.pattern.permute.xlu0 11
      %351 = vperm.xlu0 %350, %v255
      %v352 = vpop.permute.xlu0 %351
      %354 = vset.pattern.permute.xlu0 11
      %355 = vperm.xlu0 %354, %v256
      %v356 = vpop.permute.xlu0 %355
      %358 = vset.pattern.permute.xlu0 11
      %359 = vperm.xlu0 %358, %v257
      %v360 = vpop.permute.xlu0 %359
      %362 = vset.pattern.permute.xlu0 11
      %363 = vperm.xlu0 %362, %v258
      %v364 = vpop.permute.xlu0 %363
      %366 = vset.pattern.permute.xlu0 11
      %367 = vperm.xlu0 %366, %v259
      %v368 = vpop.permute.xlu0 %367
      %370 = vset.pattern.permute.xlu0 11
      %371 = vperm.xlu0 %370, %v260
      %v372 = vpop.permute.xlu0 %371
      %374 = vset.pattern.permute.xlu0 11
      %375 = vperm.xlu0 %374, %v261
      %v376 = vpop.permute.xlu0 %375
      %378 = vset.pattern.permute.xlu0 11
      %379 = vperm.xlu0 %378, %v262
      %v380 = vpop.permute.xlu0 %379
      %382 = vset.pattern.permute.xlu0 11
      %383 = vperm.xlu0 %382, %v263
      %v384 = vpop.permute.xlu0 %383
      %vm386 = vcmask 130144
      %387 = vst.msk [vmem:[%s173] sm:$0xff] %vm386, %v340
      %388 = vst.msk [vmem:[%s173 + $0x8] sm:$0xff] %vm386, %v344
      %vm389 = vcmask 125024
      %390 = vst.msk [vmem:[%s173 + $0x10] sm:$0x7] %vm389, %v348
      %391 = vst.msk [vmem:[%s173 + $0x18] sm:$0xff] %vm386, %v352
      %392 = vst.msk [vmem:[%s173 + $0x20] sm:$0xff] %vm386, %v356
      %393 = vst.msk [vmem:[%s173 + $0x28] sm:$0x7] %vm389, %v360
      %394 = vst.msk [vmem:[%s173 + $0x30] sm:$0xff] %vm386, %v364
      %395 = vst.msk [vmem:[%s173 + $0x38] sm:$0xff] %vm386, %v368
      %396 = vst.msk [vmem:[%s173 + $0x40] sm:$0x7] %vm389, %v372
      %397 = vst.msk [vmem:[%s173 + $0x48] sm:$0xff] %vm386, %v376
      %398 = vst.msk [vmem:[%s173 + $0x50] sm:$0xff] %vm386, %v380
      %399 = vst.msk [vmem:[%s173 + $0x58] sm:$0x7] %vm389, %v384
      %v400 = vld [vmem:[%s173] sm:$0xff]
      %v401 = vld [vmem:[%s173 + $0x8] sm:$0xff]
      %v402 = vld [vmem:[%s173 + $0x10] sm:$0x7]
      %s403 = scalar_lea.vmem %s152, 240
      %v404 = vld [vmem:[%s403] sm:$0xff]
      %v405 = vld [vmem:[%s403 + $0x8] sm:$0xff]
      %v406 = vld [vmem:[%s403 + $0x10] sm:$0x7]
      %vm407 = vcmask 130048
      %408 = vst.msk [vmem:[%s152] sm:$0xff] %vm407, %v400
      %409 = vst.msk [vmem:[%s152 + $0x8] sm:$0xff] %vm407, %v401
      %vm410 = vcmask 124928
      %411 = vst.msk [vmem:[%s152 + $0x10] sm:$0x7] %vm410, %v402
      %412 = vst.msk [vmem:[%s152 + $0x18] sm:$0xff] %vm407, %v400
      %413 = vst.msk [vmem:[%s152 + $0x20] sm:$0xff] %vm407, %v401
      %414 = vst.msk [vmem:[%s152 + $0x28] sm:$0x7] %vm410, %v402
      %415 = vst.msk [vmem:[%s152 + $0x30] sm:$0xff] %vm407, %v400
      %416 = vst.msk [vmem:[%s152 + $0x38] sm:$0xff] %vm407, %v401
      %417 = vst.msk [vmem:[%s152 + $0x40] sm:$0x7] %vm410, %v402
      %418 = vst.msk [vmem:[%s152 + $0x48] sm:$0xff] %vm407, %v400
      %419 = vst.msk [vmem:[%s152 + $0x50] sm:$0xff] %vm407, %v401
      %420 = vst.msk [vmem:[%s152 + $0x58] sm:$0x7] %vm410, %v402
      %421 = vst.msk [vmem:[%s152 + $0x60] sm:$0xff] %vm407, %v400
      %422 = vst.msk [vmem:[%s152 + $0x68] sm:$0xff] %vm407, %v401
      %423 = vst.msk [vmem:[%s152 + $0x70] sm:$0x7] %vm410, %v402
      %424 = vst.msk [vmem:[%s152 + $0x78] sm:$0xff] %vm407, %v400
      %425 = vst.msk [vmem:[%s152 + $0x80] sm:$0xff] %vm407, %v401
      %426 = vst.msk [vmem:[%s152 + $0x88] sm:$0x7] %vm410, %v402
      %427 = vst.msk [vmem:[%s152 + $0x90] sm:$0xff] %vm407, %v400
      %428 = vst.msk [vmem:[%s152 + $0x98] sm:$0xff] %vm407, %v401
      %429 = vst.msk [vmem:[%s152 + $0xa0] sm:$0x7] %vm410, %v402
      %s430 = scalar_lea.vmem %s152, 264
      %431 = vst.msk [vmem:[%s430] sm:$0xff] %vm407, %v404
      %432 = vst.msk [vmem:[%s430 + $0x8] sm:$0xff] %vm407, %v405
      %433 = vst.msk [vmem:[%s430 + $0x10] sm:$0x7] %vm410, %v406
      %434 = vst.msk [vmem:[%s430 + $0x18] sm:$0xff] %vm407, %v404
      %435 = vst.msk [vmem:[%s430 + $0x20] sm:$0xff] %vm407, %v405
      %436 = vst.msk [vmem:[%s430 + $0x28] sm:$0x7] %vm410, %v406
      %437 = vst.msk [vmem:[%s430 + $0x30] sm:$0xff] %vm407, %v404
      %438 = vst.msk [vmem:[%s430 + $0x38] sm:$0xff] %vm407, %v405
      %439 = vst.msk [vmem:[%s430 + $0x40] sm:$0x7] %vm410, %v406
      %440 = vst.msk [vmem:[%s430 + $0x48] sm:$0xff] %vm407, %v404
      %441 = vst.msk [vmem:[%s430 + $0x50] sm:$0xff] %vm407, %v405
      %442 = vst.msk [vmem:[%s430 + $0x58] sm:$0x7] %vm410, %v406
      %443 = vst.msk [vmem:[%s430 + $0x60] sm:$0xff] %vm407, %v404
      %444 = vst.msk [vmem:[%s430 + $0x68] sm:$0xff] %vm407, %v405
      %445 = vst.msk [vmem:[%s430 + $0x70] sm:$0x7] %vm410, %v406
      %446 = vst.msk [vmem:[%s430 + $0x78] sm:$0xff] %vm407, %v404
      %447 = vst.msk [vmem:[%s430 + $0x80] sm:$0xff] %vm407, %v405
      %448 = vst.msk [vmem:[%s430 + $0x88] sm:$0x7] %vm410, %v406
      %449 = vst.msk [vmem:[%s430 + $0x90] sm:$0xff] %vm407, %v404
      %450 = vst.msk [vmem:[%s430 + $0x98] sm:$0xff] %vm407, %v405
      %451 = vst.msk [vmem:[%s430 + $0xa0] sm:$0x7] %vm410, %v406
      %452 = vst.msk [vmem:[%s430 + $0xa8] sm:$0xff] %vm407, %v404
      %453 = vst.msk [vmem:[%s430 + $0xb0] sm:$0xff] %vm407, %v405
      %454 = vst.msk [vmem:[%s430 + $0xb8] sm:$0x7] %vm410, %v406
      %455 = vst.msk [vmem:[%s430 + $0xc0] sm:$0xff] %vm407, %v404
      %456 = vst.msk [vmem:[%s430 + $0xc8] sm:$0xff] %vm407, %v405
      %457 = vst.msk [vmem:[%s430 + $0xd0] sm:$0x7] %vm410, %v406
      %458 = vst.msk [vmem:[%s430 + $0xd8] sm:$0xff] %vm407, %v404
      %459 = vst.msk [vmem:[%s430 + $0xe0] sm:$0xff] %vm407, %v405
      %460 = vst.msk [vmem:[%s430 + $0xe8] sm:$0x7] %vm410, %v406
      %461 = vst.msk [vmem:[%s430 + $0xf0] sm:$0xff] %vm407, %v404
      %462 = vst.msk [vmem:[%s430 + $0xf8] sm:$0xff] %vm407, %v405
      %463 = vst.msk [vmem:[%s430 + $0x100] sm:$0x7] %vm410, %v406
      %p464 = scmp.lt.s32.totalorder %s16, 1
      %s465 = scalar_select %p464, %s16, 1
      %p466 = scmp.lt.s32.totalorder %s17, 2
      %s467 = scalar_select %p466, %s17, 2
      %s468 = smul.addr %s467, 66
      %s469 = smul.addr %s465, 198
      %s470 = sadd.s32 %s468, %s469
      %s471 = smul.addr %s470, 8
      %s472 = scalar_lea.vmem %s1, %s471
      // Predicated region
      $region25: #{tpu_custom_call.1} parent=23 // pred_check
        %p473 = pneg %p72
      $region26: #{tpu_custom_call.1} parent=23 // pred_check_branch
        %475 = sbr.rel (%p473) target = $region28
      $region27: #{tpu_custom_call.1} parent=23 // pred_region
        _
      $region28: #{tpu_custom_call.1} parent=23 // pred_fallthru
        _
    $region24: #{tpu_custom_call.1} parent=5 // pred_fallthru
      _
    %p476 = scmp.le.s32.totalorder 2, %s7
    // Predicated region
    $region29: #{tpu_custom_call.1} parent=5 // pred_check
      %p477 = pneg %p476
    $region30: #{tpu_custom_call.1} parent=5 // pred_check_branch
      %479 = sbr.rel (%p477) target = $region32
    $region31: #{tpu_custom_call.1} parent=5 // pred_region
      %s480 = ssub.s32 %s7, 2
      // Predicated region
      $region33: #{tpu_custom_call.1} parent=31 // pred_check
        %p481 = pneg %p78
      $region34: #{tpu_custom_call.1} parent=31 // pred_check_branch
        %483 = sbr.rel (%p481) target = $region36
      $region35: #{tpu_custom_call.1} parent=31 // pred_region
        %p484 = scmp.lt.s32.totalorder %s18, 1
        %s485 = scalar_select %p484, %s18, 1
        %p486 = scmp.lt.s32.totalorder %s19, 2
        %s487 = scalar_select %p486, %s19, 2
        %s488 = smul.addr %s487, 66
        %s489 = smul.addr %s485, 198
        %s490 = sadd.s32 %s488, %s489
        %s491 = smul.addr %s490, 8
        %s492 = scalar_lea.vmem %s1, %s491
      $region36: #{tpu_custom_call.1} parent=31 // pred_fallthru
        _
    $region32: #{tpu_custom_call.1} parent=5 // pred_fallthru
      _
  $region6: #{tpu_custom_call.1} parent=0 // loop_footer
    %s11 = sadd.s32 1, %s7
  $region7: #{tpu_custom_call.1} parent=0 // loop_footer_branch
    %6 = sbr.rel target = $region3
  $region8: #{tpu_custom_call.1} parent=0 // loop_exit
    _

</llo_original>
